<compile_context>
chip_gen: v7x
topology: tpu7x:2x2x1
jax: 0.10.0
libtpu: 0.0.40
codegen_flags: <defaults>
</compile_context>

<pallas_src>
import functools
from typing import NamedTuple

import jax
import jax.numpy as jnp
import numpy as np
from jax.experimental import pallas as pl
from jax.experimental.pallas import tpu as pltpu


# --------------------------------------------------------------------------- #
# Hardware / layout helpers
# --------------------------------------------------------------------------- #
def _round_up(n, m):
    return -(-n // m) * m


def _device_kind():
    try:
        return (jax.devices()[0].device_kind or "").lower()
    except Exception:
        return ""


def _tensorcores_per_chip():
    # v7x packs 2 TensorCores per chip; v5e/v6e have 1.
    return 2 if "v7" in _device_kind() else 1


def _mxu_align():
    # v6e/v7x MXUs are 2x 256x256 -> align large K/N dims to 256.
    # v5e's 128x128 MXUs are fully used at 128 alignment.
    kind = _device_kind()
    return 256 if ("v6" in kind or "v7" in kind) else 128


def _pad_dim(d, align):
    # Pad to 256 only when the dim is large enough for it to matter; tiny dims
    # stay at 128 so small models don't pay doubled zero-work.
    if align >= 256 and d > 128:
        return _round_up(d, 256)
    return _round_up(d, 128)


def _vmem_capacity_bytes():
    try:
        cap = getattr(pltpu.get_tpu_info(), "vmem_capacity_bytes", None)
        if cap:
            return int(cap)
    except Exception:
        pass
    kind = _device_kind()
    # v5e/v6e: 128 MiB per TensorCore; v7x (and unknown chips): 64 MiB.
    return (128 << 20) if ("v5" in kind or "v6" in kind) else (64 << 20)


def _choose_tile_b(batch, hp, n_cores, vmem_cap):
    # Per-grid-step overhead ~0.35us: bigger batch tiles on single-TC chips;
    # on 2-TC v7x keep the tile smaller so the grid has steps to shard.
    cap = 256 if n_cores >= 2 else 512
    # Bound the f32 intermediates (~3 * tile_b * Hp * 4 B) to ~1/4 of VMEM.
    act_budget = max(vmem_cap // 4, 1 << 20)
    act_cap = (act_budget // max(1, 12 * hp)) // 16 * 16
    cap = max(16, min(cap, act_cap))
    # bf16 LHS native tile is (16,128): keep the batch tile 16-aligned.
    return max(16, min(_round_up(batch, 16), cap))


def _pick_tile(dim, pref=512):
    # Largest multiple-of-128 tile <= pref that divides dim (dim is 128-mult).
    t = min(pref, dim)
    while t > 128 and dim % t != 0:
        t -= 128
    return t


_BUFFERED_ONE_SUPPORTED = None


def _buffered_one_supported():
    """Feature-detect pl.Buffered(1) once on a trivial probe kernel (narrow
    fallback: real kernel build failures are NOT silently retried)."""
    global _BUFFERED_ONE_SUPPORTED
    if _BUFFERED_ONE_SUPPORTED is None:
        def _probe(x_ref, o_ref):
            o_ref[...] = x_ref[...]
        try:
            spec = pl.BlockSpec((8, 128), lambda i: (0, 0),
                                pipeline_mode=pl.Buffered(1))
            out = pl.pallas_call(
                _probe,
                out_shape=jax.ShapeDtypeStruct((8, 128), jnp.float32),
                grid=(1,),
                in_specs=[spec],
                out_specs=pl.BlockSpec((8, 128), lambda i: (0, 0)),
            )(jnp.zeros((8, 128), jnp.float32))
            jax.block_until_ready(out)
            _BUFFERED_ONE_SUPPORTED = True
        except Exception:
            _BUFFERED_ONE_SUPPORTED = False
    return _BUFFERED_ONE_SUPPORTED


# --------------------------------------------------------------------------- #
# Prepared (padded, cast) parameters — build once, reuse every forward call
# --------------------------------------------------------------------------- #
class PreparedParams(NamedTuple):
    d_in: int
    h: int
    o: int
    dp: int
    hp: int
    op: int
    w1: jax.Array   # (dp, hp) bf16
    w2: jax.Array   # (hp, hp) bf16
    w3: jax.Array   # (hp, hp) bf16
    w4: jax.Array   # (hp, op) bf16
    bias: jax.Array  # (8, max(hp, op)) f32; rows 0..3 = b1..b4


def prepare_params(params):
    """Pad/cast weights once: bf16 (in,out)-layout weights padded to
    MXU-friendly dims, biases stacked into one sublane-dense (8, Cmax) f32
    block.  Cache the result across forward calls."""
    (w1, b1), (w2, b2), (w3, b3), (w4, b4) = params
    d_in, h = w1.shape
    o = w4.shape[1]
    align = _mxu_align()
    dp = _round_up(d_in, 128)
    hp = _pad_dim(h, align)
    op = _pad_dim(o, align)
    cmax = max(hp, op)

    def padw(w, r, c):
        w = jnp.asarray(w, jnp.bfloat16)
        return jnp.pad(w, ((0, r - w.shape[0]), (0, c - w.shape[1])))

    def padb(b, c):
        b = jnp.asarray(b, jnp.float32).reshape(1, -1)
        return jnp.pad(b, ((0, 0), (0, c - b.shape[1])))

    w1p = padw(w1, dp, hp)
    w2p = padw(w2, hp, hp)
    w3p = padw(w3, hp, hp)
    w4p = padw(w4, hp, op)
    bias = jnp.concatenate(
        [padb(b1, cmax), padb(b2, cmax), padb(b3, cmax), padb(b4, cmax),
         jnp.zeros((4, cmax), jnp.float32)], axis=0)   # (8, Cmax)

    for a in (w1p, w2p, w3p, w4p, bias):
        a.block_until_ready()
    return PreparedParams(d_in, h, o, dp, hp, op, w1p, w2p, w3p, w4p, bias)


# --------------------------------------------------------------------------- #
# Kernels
# --------------------------------------------------------------------------- #
def _fused_mlp_kernel(x_ref, w1_ref, w2_ref, w3_ref, w4_ref, b_ref, o_ref,
                      *, hp, op):
    """Fused 4-layer MLP on one batch tile: bf16 operands on the MXU,
    f32 accumulation / bias / ReLU on the VPU."""
    bias = b_ref[...]                                   # (8, Cmax) f32
    h = jnp.dot(x_ref[...], w1_ref[...],
                preferred_element_type=jnp.float32) + bias[0:1, :hp]
    h = jnp.maximum(h, 0.0).astype(jnp.bfloat16)
    h = jnp.dot(h, w2_ref[...],
                preferred_element_type=jnp.float32) + bias[1:2, :hp]
    h = jnp.maximum(h, 0.0).astype(jnp.bfloat16)
    h = jnp.dot(h, w3_ref[...],
                preferred_element_type=jnp.float32) + bias[2:3, :hp]
    h = jnp.dot(h.astype(jnp.bfloat16), w4_ref[...],
                preferred_element_type=jnp.float32) + bias[3:4, :op]
    o_ref[...] = h.astype(o_ref.dtype)
    # TODO(synk): running_activations accumulation (accumulate_metrics) is a
    # stateful training-metric buffer, not part of the returned forward value.


def _linear_kernel(x_ref, w_ref, b_ref, o_ref, acc_ref, *, relu):
    """One (M,N,K)-tiled linear layer with f32 VMEM accumulator."""
    @pl.when(pl.program_id(2) == 0)
    def _():
        acc_ref[...] = jnp.zeros_like(acc_ref)

    acc_ref[...] += jnp.dot(x_ref[...], w_ref[...],
                            preferred_element_type=jnp.float32)

    @pl.when(pl.program_id(2) == pl.num_programs(2) - 1)
    def _():
        h = acc_ref[...] + b_ref[...]
        if relu:
            h = jnp.maximum(h, 0.0)
        o_ref[...] = h.astype(o_ref.dtype)


def _linear_tiled(x, w, b, *, relu, out_dtype, tm, vmem_budget):
    m, k = x.shape
    _, n = w.shape
    tn = _pick_tile(n, 512)
    tk = _pick_tile(k, 512)
    out_bytes = np.dtype(out_dtype).itemsize
    need = (2 * (tm * tk * 2 + tk * tn * 2 + tn * 4 + tm * tn * out_bytes)
            + tm * tn * 4 + (2 << 20))
    vmem_limit = int(min(max(need, 16 << 20), vmem_budget))
    grid = (m // tm, n // tn, k // tk)
    return pl.pallas_call(
        functools.partial(_linear_kernel, relu=relu),
        out_shape=jax.ShapeDtypeStruct((m, n), out_dtype),
        grid=grid,
        in_specs=[
            pl.BlockSpec((tm, tk), lambda i, j, l: (i, l)),
            pl.BlockSpec((tk, tn), lambda i, j, l: (l, j)),
            pl.BlockSpec((1, tn), lambda i, j, l: (0, j)),
        ],
        out_specs=pl.BlockSpec((tm, tn), lambda i, j, l: (i, j)),
        scratch_shapes=[pltpu.VMEM((tm, tn), jnp.float32)],
        compiler_params=pltpu.CompilerParams(
            dimension_semantics=("parallel", "parallel", "arbitrary"),
            vmem_limit_bytes=vmem_limit),
        cost_estimate=pl.CostEstimate(
            flops=2 * m * n * k, transcendentals=0,
            bytes_accessed=m * k * 2 + k * n * 2 + n * 4 + m * n * out_bytes),
    )(x, w, b)


def _forward_tiled(xp, p, batch, tile_b, out_dtype, vmem_budget):
    """Per-layer tiled path for H too large to keep all four weight matrices
    VMEM-resident (Hp >~ 2.8k on v7x, ~5k on v5e/v6e)."""
    b1 = p.bias[0:1, :p.hp]
    b2 = p.bias[1:2, :p.hp]
    b3 = p.bias[2:3, :p.hp]
    b4 = p.bias[3:4, :p.op]
    h = _linear_tiled(xp, p.w1, b1, relu=True, out_dtype=jnp.bfloat16,
                      tm=tile_b, vmem_budget=vmem_budget)
    h = _linear_tiled(h, p.w2, b2, relu=True, out_dtype=jnp.bfloat16,
                      tm=tile_b, vmem_budget=vmem_budget)
    h = _linear_tiled(h, p.w3, b3, relu=False, out_dtype=jnp.bfloat16,
                      tm=tile_b, vmem_budget=vmem_budget)
    out = _linear_tiled(h, p.w4, b4, relu=False, out_dtype=out_dtype,
                        tm=tile_b, vmem_budget=vmem_budget)
    return out[:batch, :p.o]


# --------------------------------------------------------------------------- #
# Forward wrapper
# --------------------------------------------------------------------------- #
def hashed_network_forward(x, params, *, tile_b=None, force_path=None,
                           out_dtype=jnp.float32):
    """Pallas TPU implementation of HashedNetwork.forward (rehash=False).

    `params` may be the raw ((w, b), ...) tuple or a PreparedParams (preferred:
    call prepare_params once and reuse it so weights are not re-padded / cast
    on every call).  `force_path` in {None, "fused", "tiled"}.
    """
    if not isinstance(params, PreparedParams):
        params = prepare_params(params)
    p = params
    batch, d_in = x.shape
    assert d_in == p.d_in, (d_in, p.d_in)

    vmem_cap = _vmem_capacity_bytes()
    vmem_budget = int(0.9 * vmem_cap)
    n_cores = _tensorcores_per_chip()
    if tile_b is None:
        tile_b = _choose_tile_b(batch, p.hp, n_cores, vmem_cap)
    tile_b = max(16, _round_up(tile_b, 16))
    bp = _round_up(batch, tile_b)

    out_bytes = np.dtype(out_dtype).itemsize
    cmax = p.bias.shape[1]

    # Only x needs per-call padding; weights/biases are prepared once.
    xp = jnp.pad(x.astype(jnp.bfloat16), ((0, bp - batch), (0, p.dp - d_in)))

    # Can the fused-resident-weights kernel fit in this chip's VMEM?
    single_buf = _buffered_one_supported()
    weight_vmem = ((p.w1.size + p.w2.size + p.w3.size + p.w4.size) * 2
                   + p.bias.size * 4)
    io_vmem = 2 * (tile_b * p.dp * 2 + tile_b * p.op * out_bytes)
    act_vmem = 3 * tile_b * p.hp * 4 + 2 * tile_b * max(p.hp, p.op) * 2
    fused_need = ((1 if single_buf else 2) * weight_vmem
                  + io_vmem + act_vmem + (4 << 20))

    if force_path == "tiled" or (force_path is None
                                 and fused_need > vmem_budget):
        return _forward_tiled(xp, p, batch, tile_b, out_dtype, vmem_budget)

    grid = (bp // tile_b,)
    flops = 2 * bp * (p.dp * p.hp + 2 * p.hp * p.hp + p.hp * p.op)
    bytes_accessed = xp.size * 2 + bp * p.op * out_bytes + weight_vmem
    vmem_limit = int(min(max(fused_need, 16 << 20), vmem_budget))

    def const_spec(shape):
        # Weights/biases never change across the batch grid axis; keep them
        # single-buffered when this jax version supports Buffered(1).
        if single_buf:
            return pl.BlockSpec(shape, lambda i: (0, 0),
                                pipeline_mode=pl.Buffered(1))
        return pl.BlockSpec(shape, lambda i: (0, 0))

    out = pl.pallas_call(
        functools.partial(_fused_mlp_kernel, hp=p.hp, op=p.op),
        out_shape=jax.ShapeDtypeStruct((bp, p.op), out_dtype),
        grid=grid,
        in_specs=[
            pl.BlockSpec((tile_b, p.dp), lambda i: (i, 0)),   # x batch tile
            const_spec((p.dp, p.hp)),                         # fc1 W
            const_spec((p.hp, p.hp)),                         # fc2 W
            const_spec((p.hp, p.hp)),                         # fc3 W
            const_spec((p.hp, p.op)),                         # fc4 W
            const_spec((8, cmax)),                            # stacked biases
        ],
        out_specs=pl.BlockSpec((tile_b, p.op), lambda i: (i, 0)),
        compiler_params=pltpu.CompilerParams(
            dimension_semantics=("parallel",),
            vmem_limit_bytes=vmem_limit),
        cost_estimate=pl.CostEstimate(
            flops=flops, transcendentals=0, bytes_accessed=bytes_accessed),
    )(xp, p.w1, p.w2, p.w3, p.w4, p.bias)
    # TODO(synk): for 1-2 batch tiles the one-time weight DMA is exposed;
    # stream w2/w3/w4 with a manual double-buffer (pl.ANY + make_async_copy)
    # so layer-k weight fetch overlaps the layer-(k-1) matmul.
    return out[:batch, :p.o]


# --------------------------------------------------------------------------- #
# Parameter init + pure-JAX reference
# --------------------------------------------------------------------------- #
def init_params(key, input_dim, hidden_dim, output_dim):
    """HashedFC.init_weights: W ~ U(-0.05, 0.05), b = 0.  Weights stored
    (in_features, out_features) — transposed vs nn.Linear — so the kernel
    computes x @ W directly."""
    def layer(k, fan_in, fan_out):
        w = jax.random.uniform(k, (fan_in, fan_out), jnp.float32, -0.05, 0.05)
        b = jnp.zeros((1, fan_out), jnp.float32)
        return w, b

    k1, k2, k3, k4 = jax.random.split(key, 4)
    return (layer(k1, input_dim, hidden_dim),
            layer(k2, hidden_dim, hidden_dim),
            layer(k3, hidden_dim, hidden_dim),
            layer(k4, hidden_dim, output_dim))


def reference_forward(x, params):
    """Pure-JAX reference with the same bf16-operand / f32-accumulate recipe."""
    (w1, b1), (w2, b2), (w3, b3), (w4, b4) = params
    bf16, f32 = jnp.bfloat16, jnp.float32
    h = jnp.dot(x.astype(bf16), w1.astype(bf16), preferred_element_type=f32) + b1
    h = jnp.maximum(h, 0.0)
    h = jnp.dot(h.astype(bf16), w2.astype(bf16), preferred_element_type=f32) + b2
    h = jnp.maximum(h, 0.0)
    h = jnp.dot(h.astype(bf16), w3.astype(bf16), preferred_element_type=f32) + b3
    h = jnp.dot(h.astype(bf16), w4.astype(bf16), preferred_element_type=f32) + b4
    return h


if __name__ == "__main__":
    input_dim, hidden_dim, output_dim = 16, 32, 8
    batch = 8

    key = jax.random.PRNGKey(0)
    kx, kp = jax.random.split(key)
    x = jax.random.normal(kx, (batch, input_dim), jnp.float32)
    params = init_params(kp, input_dim, hidden_dim, output_dim)

    # Pad/cast the weights ONCE; reuse across forward calls.
    prepared = prepare_params(params)
    ref = reference_forward(x, params)

    # Fused-resident path (auto-selected at these sizes).
    out = jax.block_until_ready(hashed_network_forward(x, prepared))
    assert out.shape == (batch, output_dim), out.shape
    assert jnp.allclose(out, ref, atol=1e-6, rtol=1e-2), "fused mismatch"

    # Exercise the per-layer tiled fallback path (used for very large H).
    out_tiled = jax.block_until_ready(
        hashed_network_forward(x, prepared, force_path="tiled"))
    assert out_tiled.shape == (batch, output_dim), out_tiled.shape
    assert jnp.allclose(out_tiled, ref, atol=1e-6, rtol=1e-2), "tiled mismatch"

    # TODO(synk): the rehash branch (SimHash/LSH bucket rebuild + weight
    # pruning) is host-side data-structure surgery, not a device kernel.
    print("KERNEL_OK")
</pallas_src>

<mosaic_0001>
module attributes {stable_mosaic.version = 11 : i64} {
  func.func @_probe(%arg0: i32, %arg1: memref<8x128xf32, #tpu.memory_space<vmem>>, %arg2: memref<8x128xf32, #tpu.memory_space<vmem>>) attributes {dimension_semantics = [#tpu.dimension_semantics<arbitrary>], iteration_bounds = array<i64: 1>, scalar_prefetch = 0 : i64, scratch_operands = 0 : i64, tpu.core_type = #tpu.core_type<tc>, window_params = [{pipeline_mode = #tpu.pipeline_mode<synchronous>, transform_indices = @transform_0, window_bounds = array<i64: 8, 128>}, {pipeline_mode = #tpu.pipeline_mode<synchronous>, transform_indices = @transform_1, window_bounds = array<i64: 8, 128>}]} {
    %c0 = arith.constant 0 : index
    %c0_0 = arith.constant 0 : index
    %0 = vector.load %arg1[%c0, %c0_0] : memref<8x128xf32, #tpu.memory_space<vmem>>, vector<8x128xf32>
    %c0_1 = arith.constant 0 : index
    %c0_2 = arith.constant 0 : index
    %1 = vector.load %arg2[%c0_1, %c0_2] : memref<8x128xf32, #tpu.memory_space<vmem>>, vector<8x128xf32>
    tpu.vector_store %arg2[%c0_1, %c0_2], %0 {strides = array<i32>} : memref<8x128xf32, #tpu.memory_space<vmem>>, vector<8x128xf32>,
    return
  }
  func.func @transform_0(%arg0: i32) -> (i32, i32) {
    %c0_i32 = arith.constant 0 : i32
    %c0_i32_0 = arith.constant 0 : i32
    %c0_i32_1 = arith.constant 0 : i32
    return %c0_i32, %c0_i32_0 : i32, i32
  }
  func.func @transform_1(%arg0: i32) -> (i32, i32) {
    %c0_i32 = arith.constant 0 : i32
    %c0_i32_0 = arith.constant 0 : i32
    %c0_i32_1 = arith.constant 0 : i32
    return %c0_i32, %c0_i32_0 : i32, i32
  }
}

module attributes {stable_mosaic.version = 11 : i64} {
  func.func @_fused_mlp_kernel(%arg0: i32, %arg1: memref<16x128xbf16, #tpu.memory_space<vmem>>, %arg2: memref<128x128xbf16, #tpu.memory_space<vmem>>, %arg3: memref<128x128xbf16, #tpu.memory_space<vmem>>, %arg4: memref<128x128xbf16, #tpu.memory_space<vmem>>, %arg5: memref<128x128xbf16, #tpu.memory_space<vmem>>, %arg6: memref<8x128xf32, #tpu.memory_space<vmem>>, %arg7: memref<16x128xf32, #tpu.memory_space<vmem>>) attributes {dimension_semantics = [#tpu.dimension_semantics<parallel>], iteration_bounds = array<i64: 1>, scalar_prefetch = 0 : i64, scratch_operands = 0 : i64, tpu.core_type = #tpu.core_type<tc>, window_params = [{transform_indices = @transform_0, window_bounds = array<i64: 16, 128>}, {pipeline_mode = #tpu.pipeline_mode<synchronous>, transform_indices = @transform_1, window_bounds = array<i64: 128, 128>}, {pipeline_mode = #tpu.pipeline_mode<synchronous>, transform_indices = @transform_2, window_bounds = array<i64: 128, 128>}, {pipeline_mode = #tpu.pipeline_mode<synchronous>, transform_indices = @transform_3, window_bounds = array<i64: 128, 128>}, {pipeline_mode = #tpu.pipeline_mode<synchronous>, transform_indices = @transform_4, window_bounds = array<i64: 128, 128>}, {pipeline_mode = #tpu.pipeline_mode<synchronous>, transform_indices = @transform_5, window_bounds = array<i64: 8, 128>}, {transform_indices = @transform_6, window_bounds = array<i64: 16, 128>}]} {
    %c0 = arith.constant 0 : index
    %c0_0 = arith.constant 0 : index
    %0 = vector.load %arg6[%c0, %c0_0] : memref<8x128xf32, #tpu.memory_space<vmem>>, vector<8x128xf32>
    %c0_1 = arith.constant 0 : index
    %c0_2 = arith.constant 0 : index
    %1 = vector.load %arg1[%c0_1, %c0_2] : memref<16x128xbf16, #tpu.memory_space<vmem>>, vector<16x128xbf16>
    %c0_3 = arith.constant 0 : index
    %c0_4 = arith.constant 0 : index
    %2 = vector.load %arg2[%c0_3, %c0_4] : memref<128x128xbf16, #tpu.memory_space<vmem>>, vector<128x128xbf16>
    %cst = arith.constant dense<0.000000e+00> : vector<16x128xf32>
    %3 = tpu.matmul %1, %2, %cst {dimension_numbers = #tpu.dot_dimension_numbers<[1], [0], [0], [1], [0, 0, 1, 1], [], []>} : vector<16x128xbf16>, vector<128x128xbf16>, vector<16x128xf32> -> vector<16x128xf32>
    %4 = vector.extract_strided_slice %0 {offsets = [0, 0], sizes = [1, 128], strides = [1, 1]} : vector<8x128xf32> to vector<1x128xf32>
    %5 = vector.broadcast %4 : vector<1x128xf32> to vector<16x128xf32>
    %6 = arith.addf %3, %5 : vector<16x128xf32>
    %cst_5 = arith.constant 0.000000e+00 : f32
    %7 = vector.broadcast %cst_5 : f32 to vector<16x128xf32>
    %8 = arith.maximumf %6, %7 : vector<16x128xf32>
    %9 = arith.truncf %8 : vector<16x128xf32> to vector<16x128xbf16>
    %c0_6 = arith.constant 0 : index
    %c0_7 = arith.constant 0 : index
    %10 = vector.load %arg3[%c0_6, %c0_7] : memref<128x128xbf16, #tpu.memory_space<vmem>>, vector<128x128xbf16>
    %cst_8 = arith.constant dense<0.000000e+00> : vector<16x128xf32>
    %11 = tpu.matmul %9, %10, %cst_8 {dimension_numbers = #tpu.dot_dimension_numbers<[1], [0], [0], [1], [0, 0, 1, 1], [], []>} : vector<16x128xbf16>, vector<128x128xbf16>, vector<16x128xf32> -> vector<16x128xf32>
    %12 = vector.extract_strided_slice %0 {offsets = [1, 0], sizes = [1, 128], strides = [1, 1]} : vector<8x128xf32> to vector<1x128xf32>
    %13 = vector.broadcast %12 : vector<1x128xf32> to vector<16x128xf32>
    %14 = arith.addf %11, %13 : vector<16x128xf32>
    %cst_9 = arith.constant 0.000000e+00 : f32
    %15 = vector.broadcast %cst_9 : f32 to vector<16x128xf32>
    %16 = arith.maximumf %14, %15 : vector<16x128xf32>
    %17 = arith.truncf %16 : vector<16x128xf32> to vector<16x128xbf16>
    %c0_10 = arith.constant 0 : index
    %c0_11 = arith.constant 0 : index
    %18 = vector.load %arg4[%c0_10, %c0_11] : memref<128x128xbf16, #tpu.memory_space<vmem>>, vector<128x128xbf16>
    %cst_12 = arith.constant dense<0.000000e+00> : vector<16x128xf32>
    %19 = tpu.matmul %17, %18, %cst_12 {dimension_numbers = #tpu.dot_dimension_numbers<[1], [0], [0], [1], [0, 0, 1, 1], [], []>} : vector<16x128xbf16>, vector<128x128xbf16>, vector<16x128xf32> -> vector<16x128xf32>
    %20 = vector.extract_strided_slice %0 {offsets = [2, 0], sizes = [1, 128], strides = [1, 1]} : vector<8x128xf32> to vector<1x128xf32>
    %21 = vector.broadcast %20 : vector<1x128xf32> to vector<16x128xf32>
    %22 = arith.addf %19, %21 : vector<16x128xf32>
    %23 = arith.truncf %22 : vector<16x128xf32> to vector<16x128xbf16>
    %c0_13 = arith.constant 0 : index
    %c0_14 = arith.constant 0 : index
    %24 = vector.load %arg5[%c0_13, %c0_14] : memref<128x128xbf16, #tpu.memory_space<vmem>>, vector<128x128xbf16>
    %cst_15 = arith.constant dense<0.000000e+00> : vector<16x128xf32>
    %25 = tpu.matmul %23, %24, %cst_15 {dimension_numbers = #tpu.dot_dimension_numbers<[1], [0], [0], [1], [0, 0, 1, 1], [], []>} : vector<16x128xbf16>, vector<128x128xbf16>, vector<16x128xf32> -> vector<16x128xf32>
    %26 = vector.extract_strided_slice %0 {offsets = [3, 0], sizes = [1, 128], strides = [1, 1]} : vector<8x128xf32> to vector<1x128xf32>
    %27 = vector.broadcast %26 : vector<1x128xf32> to vector<16x128xf32>
    %28 = arith.addf %25, %27 : vector<16x128xf32>
    %c0_16 = arith.constant 0 : index
    %c0_17 = arith.constant 0 : index
    %29 = vector.load %arg7[%c0_16, %c0_17] : memref<16x128xf32, #tpu.memory_space<vmem>>, vector<16x128xf32>
    tpu.vector_store %arg7[%c0_16, %c0_17], %28 {strides = array<i32>} : memref<16x128xf32, #tpu.memory_space<vmem>>, vector<16x128xf32>,
    return
  }
  func.func @transform_0(%arg0: i32) -> (i32, i32) {
    %c0_i32 = arith.constant 0 : i32
    %c0_i32_0 = arith.constant 0 : i32
    return %arg0, %c0_i32 : i32, i32
  }
  func.func @transform_1(%arg0: i32) -> (i32, i32) {
    %c0_i32 = arith.constant 0 : i32
    %c0_i32_0 = arith.constant 0 : i32
    %c0_i32_1 = arith.constant 0 : i32
    return %c0_i32, %c0_i32_0 : i32, i32
  }
  func.func @transform_2(%arg0: i32) -> (i32, i32) {
    %c0_i32 = arith.constant 0 : i32
    %c0_i32_0 = arith.constant 0 : i32
    %c0_i32_1 = arith.constant 0 : i32
    return %c0_i32, %c0_i32_0 : i32, i32
  }
  func.func @transform_3(%arg0: i32) -> (i32, i32) {
    %c0_i32 = arith.constant 0 : i32
    %c0_i32_0 = arith.constant 0 : i32
    %c0_i32_1 = arith.constant 0 : i32
    return %c0_i32, %c0_i32_0 : i32, i32
  }
  func.func @transform_4(%arg0: i32) -> (i32, i32) {
    %c0_i32 = arith.constant 0 : i32
    %c0_i32_0 = arith.constant 0 : i32
    %c0_i32_1 = arith.constant 0 : i32
    return %c0_i32, %c0_i32_0 : i32, i32
  }
  func.func @transform_5(%arg0: i32) -> (i32, i32) {
    %c0_i32 = arith.constant 0 : i32
    %c0_i32_0 = arith.constant 0 : i32
    %c0_i32_1 = arith.constant 0 : i32
    return %c0_i32, %c0_i32_0 : i32, i32
  }
  func.func @transform_6(%arg0: i32) -> (i32, i32) {
    %c0_i32 = arith.constant 0 : i32
    %c0_i32_0 = arith.constant 0 : i32
    return %arg0, %c0_i32 : i32, i32
  }
}

</mosaic_0001>

<llo_original>
// kernel: tpu_custom_call.1
$region0: #{tpu_custom_call.1}
  #allocation0 [shape = 'u32[]', space=smem, size = 0x4, offset = 0x4, fixed_abs, tag = 'smem constant byte address 0x4 - core index']
  #allocation1 [shape = 'u32[144,128]{1,0:T(1,128)}', space=vmem, size = 0x12000, scoped, tag = 'internal scratch']
  %s0 = inlined_call_operand.hbm [shape: f32[8,128], index: 0, kind: input, shape index: {}]
  %s1 = inlined_call_operand.hbm [shape: f32[8,128], index: 1, kind: output, shape index: {}]
  %s2 = sld [smem:[#allocation0]]
  $region18: #{tpu_custom_call.1} parent=0
    _
  %s4 = ssub.s32 1, %s2
  %s5 = scalar_select 0, %s4, %s2
  $region1: #{tpu_custom_call.1} parent=0
    #allocation2 [shape = 'u8[4096]{0}', space=vmem, size = 0x1000, scoped, tag = 'input window, operand 0, single buffered']
    #allocation3 [shape = 's32[1]{0}', space=sflag, size = 0x4, scoped, tag = 'scoped memory for tpu_custom_call.1']
    #allocation4 [shape = 's32[1]{0}', space=sflag, size = 0x4, scoped, tag = 'scoped memory for tpu_custom_call.1']
    #allocation5 [shape = 'u8[4096]{0}', space=vmem, size = 0x1000, scoped, tag = 'output window, operand 0, single buffered']
    %6 = vsyncpa [#allocation3], 0
    %7 = vsyncpa [#allocation4], 0
    // Predicated region
    $region2: #{tpu_custom_call.1} parent=1 // pred_check
      _
    $region3: #{tpu_custom_call.1} parent=1 // pred_check_branch
      %9 = sbr.rel (0) target = $region5
    $region4: #{tpu_custom_call.1} parent=1 // pred_region
      %s11 = ssub.s32 128, 128
      %12 = vsyncadd [#allocation3], %s11
      %s14 = sshll.u32 [#allocation2], 4
      %s15 = int_to_ptr.vmem [resolvable:$true] %s14
      %17 = dma.hbm_to_vmem [thread:$0]  %s0, 128, %s15, [#allocation3]
    $region5: #{tpu_custom_call.1} parent=1 // pred_fallthru
      _
    // Predicated region
    $region6: #{tpu_custom_call.1} parent=1 // pred_check
      _
    $region7: #{tpu_custom_call.1} parent=1 // pred_check_branch
      %19 = sbr.rel (0) target = $region9
    $region8: #{tpu_custom_call.1} parent=1 // pred_region
      %20 = dma.done [#allocation3], 128
    $region9: #{tpu_custom_call.1} parent=1 // pred_fallthru
      _
    %v21 = vld [vmem:[#allocation2] sm:$0xff]
    %22 = vst [vmem:[#allocation5] sm:$0xff] %v21
    // Predicated region
    $region10: #{tpu_custom_call.1} parent=1 // pred_check
      _
    $region11: #{tpu_custom_call.1} parent=1 // pred_check_branch
      %24 = sbr.rel (0) target = $region13
    $region12: #{tpu_custom_call.1} parent=1 // pred_region
      %s26 = ssub.s32 128, 128
      %27 = vsyncadd [#allocation4], %s26
      %s29 = sshll.u32 [#allocation5], 4
      %s30 = int_to_ptr.vmem [resolvable:$true] %s29
      %32 = dma.vmem_to_hbm [thread:$0]  %s30, 128, %s1, [#allocation4]
    $region13: #{tpu_custom_call.1} parent=1 // pred_fallthru
      _
    // Predicated region
    $region14: #{tpu_custom_call.1} parent=1 // pred_check
      _
    $region15: #{tpu_custom_call.1} parent=1 // pred_check_branch
      %34 = sbr.rel (0) target = $region17
    $region16: #{tpu_custom_call.1} parent=1 // pred_region
      %35 = dma.done [#allocation4], 128
    $region17: #{tpu_custom_call.1} parent=1 // pred_fallthru
      _
    %36 = vsyncpa [#allocation3], 1
    %37 = vsyncpa [#allocation4], 1

// kernel: tpu_custom_call.1
$region0: #{tpu_custom_call.1}
  #allocation0 [shape = 'u32[]', space=smem, size = 0x4, offset = 0x4, fixed_abs, tag = 'smem constant byte address 0x4 - core index']
  #allocation1 [shape = 'u32[144,128]{1,0:T(1,128)}', space=vmem, size = 0x12000, scoped, tag = 'internal scratch']
  %s0 = inlined_call_operand.hbm [shape: bf16[16,128], index: 0, kind: input, shape index: {}]
  %s1 = inlined_call_operand.hbm [shape: bf16[128,128], index: 1, kind: input, shape index: {}]
  %s2 = inlined_call_operand.hbm [shape: bf16[128,128], index: 2, kind: input, shape index: {}]
  %s3 = inlined_call_operand.hbm [shape: bf16[128,128], index: 3, kind: input, shape index: {}]
  %s4 = inlined_call_operand.hbm [shape: bf16[128,128], index: 4, kind: input, shape index: {}]
  %s5 = inlined_call_operand.vmem [shape: f32[8,128], index: 5, kind: input, shape index: {}]
  %s6 = inlined_call_operand.hbm [shape: f32[16,128], index: 6, kind: output, shape index: {}]
  %s7 = sld [smem:[#allocation0]]
  $region54: #{tpu_custom_call.1} parent=0
    _
  %s9 = ssub.s32 1, %s7
  %s10 = scalar_select 0, %s9, %s7
  $region1: #{tpu_custom_call.1} parent=0
    #allocation2 [shape = 'u8[4096]{0}', space=vmem, size = 0x1000, scoped, tag = 'input window, operand 0, single buffered']
    #allocation3 [shape = 's32[1]{0}', space=sflag, size = 0x4, scoped, tag = 'scoped memory for tpu_custom_call.1']
    #allocation4 [shape = 's32[1]{0}', space=sflag, size = 0x4, scoped, tag = 'scoped memory for tpu_custom_call.1']
    #allocation5 [shape = 'u8[32768]{0}', space=vmem, size = 0x8000, scoped, tag = 'input window, operand 1, single buffered']
    #allocation6 [shape = 's32[1]{0}', space=sflag, size = 0x4, scoped, tag = 'scoped memory for tpu_custom_call.1']
    #allocation7 [shape = 'u8[32768]{0}', space=vmem, size = 0x8000, scoped, tag = 'input window, operand 2, single buffered']
    #allocation8 [shape = 'u8[32768]{0}', space=vmem, size = 0x8000, scoped, tag = 'input window, operand 3, single buffered']
    #allocation9 [shape = 's32[1]{0}', space=sflag, size = 0x4, scoped, tag = 'scoped memory for tpu_custom_call.1']
    #allocation10 [shape = 'u8[32768]{0}', space=vmem, size = 0x8000, scoped, tag = 'input window, operand 4, single buffered']
    #allocation11 [shape = 'u8[8192]{0}', space=vmem, size = 0x2000, scoped, tag = 'output window, operand 0, single buffered']
    %11 = vsyncpa [#allocation3], 0
    %12 = vsyncpa [#allocation6], 0
    %13 = vsyncpa [#allocation9], 0
    %14 = vsyncpa [#allocation4], 0
    // Predicated region
    $region2: #{tpu_custom_call.1} parent=1 // pred_check
      _
    $region3: #{tpu_custom_call.1} parent=1 // pred_check_branch
      %16 = sbr.rel (0) target = $region5
    $region4: #{tpu_custom_call.1} parent=1 // pred_region
      %s18 = ssub.s32 128, 128
      %19 = vsyncadd [#allocation3], %s18
      %s20 = sshll.u32 [#allocation2], 4
      %s21 = int_to_ptr.vmem [resolvable:$true] %s20
      %26 = dma.hbm_to_vmem [thread:$0]  %s0, 128, %s21, [#allocation3], 64, 64, 4
    $region5: #{tpu_custom_call.1} parent=1 // pred_fallthru
      _
    // Predicated region
    $region6: #{tpu_custom_call.1} parent=1 // pred_check
      _
    $region7: #{tpu_custom_call.1} parent=1 // pred_check_branch
      %28 = sbr.rel (0) target = $region9
    $region8: #{tpu_custom_call.1} parent=1 // pred_region
      %s30 = ssub.s32 1024, 1024
      %31 = vsyncadd [#allocation6], %s30
      %s32 = sshll.u32 [#allocation5], 4
      %s33 = int_to_ptr.vmem [resolvable:$true] %s32
      %38 = dma.hbm_to_vmem [thread:$0]  %s1, 1024, %s33, [#allocation6], 64, 64, 4
    $region9: #{tpu_custom_call.1} parent=1 // pred_fallthru
      _
    // Predicated region
    $region10: #{tpu_custom_call.1} parent=1 // pred_check
      _
    $region11: #{tpu_custom_call.1} parent=1 // pred_check_branch
      %40 = sbr.rel (0) target = $region13
    $region12: #{tpu_custom_call.1} parent=1 // pred_region
      %s42 = ssub.s32 1024, 1024
      %43 = vsyncadd [#allocation6], %s42
      %s44 = sshll.u32 [#allocation7], 4
      %s45 = int_to_ptr.vmem [resolvable:$true] %s44
      %50 = dma.hbm_to_vmem [thread:$0]  %s2, 1024, %s45, [#allocation6], 64, 64, 4
    $region13: #{tpu_custom_call.1} parent=1 // pred_fallthru
      _
    // Predicated region
    $region14: #{tpu_custom_call.1} parent=1 // pred_check
      _
    $region15: #{tpu_custom_call.1} parent=1 // pred_check_branch
      %52 = sbr.rel (0) target = $region17
    $region16: #{tpu_custom_call.1} parent=1 // pred_region
      %s54 = ssub.s32 1024, 1024
      %55 = vsyncadd [#allocation9], %s54
      %s56 = sshll.u32 [#allocation8], 4
      %s57 = int_to_ptr.vmem [resolvable:$true] %s56
      %62 = dma.hbm_to_vmem [thread:$0]  %s3, 1024, %s57, [#allocation9], 64, 64, 4
    $region17: #{tpu_custom_call.1} parent=1 // pred_fallthru
      _
    // Predicated region
    $region18: #{tpu_custom_call.1} parent=1 // pred_check
      _
    $region19: #{tpu_custom_call.1} parent=1 // pred_check_branch
      %64 = sbr.rel (0) target = $region21
    $region20: #{tpu_custom_call.1} parent=1 // pred_region
      %s66 = ssub.s32 1024, 1024
      %67 = vsyncadd [#allocation9], %s66
      %s68 = sshll.u32 [#allocation10], 4
      %s69 = int_to_ptr.vmem [resolvable:$true] %s68
      %74 = dma.hbm_to_vmem [thread:$0]  %s4, 1024, %s69, [#allocation9], 64, 64, 4
    $region21: #{tpu_custom_call.1} parent=1 // pred_fallthru
      _
    // Predicated region
    $region22: #{tpu_custom_call.1} parent=1 // pred_check
      _
    $region23: #{tpu_custom_call.1} parent=1 // pred_check_branch
      %76 = sbr.rel (0) target = $region25
    $region24: #{tpu_custom_call.1} parent=1 // pred_region
      _
    $region25: #{tpu_custom_call.1} parent=1 // pred_fallthru
      _
    // Predicated region
    $region26: #{tpu_custom_call.1} parent=1 // pred_check
      _
    $region27: #{tpu_custom_call.1} parent=1 // pred_check_branch
      %78 = sbr.rel (0) target = $region29
    $region28: #{tpu_custom_call.1} parent=1 // pred_region
      %79 = dma.done [#allocation3], 128
    $region29: #{tpu_custom_call.1} parent=1 // pred_fallthru
      _
    // Predicated region
    $region30: #{tpu_custom_call.1} parent=1 // pred_check
      _
    $region31: #{tpu_custom_call.1} parent=1 // pred_check_branch
      %81 = sbr.rel (0) target = $region33
    $region32: #{tpu_custom_call.1} parent=1 // pred_region
      %82 = dma.done [#allocation6], 1024
    $region33: #{tpu_custom_call.1} parent=1 // pred_fallthru
      _
    // Predicated region
    $region34: #{tpu_custom_call.1} parent=1 // pred_check
      _
    $region35: #{tpu_custom_call.1} parent=1 // pred_check_branch
      %84 = sbr.rel (0) target = $region37
    $region36: #{tpu_custom_call.1} parent=1 // pred_region
      %85 = dma.done [#allocation6], 1024
    $region37: #{tpu_custom_call.1} parent=1 // pred_fallthru
      _
    // Predicated region
    $region38: #{tpu_custom_call.1} parent=1 // pred_check
      _
    $region39: #{tpu_custom_call.1} parent=1 // pred_check_branch
      %87 = sbr.rel (0) target = $region41
    $region40: #{tpu_custom_call.1} parent=1 // pred_region
      %88 = dma.done [#allocation9], 1024
    $region41: #{tpu_custom_call.1} parent=1 // pred_fallthru
      _
    // Predicated region
    $region42: #{tpu_custom_call.1} parent=1 // pred_check
      _
    $region43: #{tpu_custom_call.1} parent=1 // pred_check_branch
      %90 = sbr.rel (0) target = $region45
    $region44: #{tpu_custom_call.1} parent=1 // pred_region
      %91 = dma.done [#allocation9], 1024
    $region45: #{tpu_custom_call.1} parent=1 // pred_fallthru
      _
    %v93 = vld [vmem:[%s5] sm:$0xff]
    %v94 = vld [vmem:[#allocation2] sm:$0xf]
    %v95 = vld [vmem:[#allocation2 + $0x4] sm:$0xf]
    %v96 = vld [vmem:[#allocation5] sm:$0xf]
    %v97 = vld [vmem:[#allocation5 + $0x4] sm:$0xf]
    %v98 = vld [vmem:[#allocation5 + $0x8] sm:$0xf]
    %v99 = vld [vmem:[#allocation5 + $0xc] sm:$0xf]
    %v100 = vld [vmem:[#allocation5 + $0x10] sm:$0xf]
    %v101 = vld [vmem:[#allocation5 + $0x14] sm:$0xf]
    %v102 = vld [vmem:[#allocation5 + $0x18] sm:$0xf]
    %v103 = vld [vmem:[#allocation5 + $0x1c] sm:$0xf]
    %v104 = vld [vmem:[#allocation5 + $0x20] sm:$0xf]
    %v105 = vld [vmem:[#allocation5 + $0x24] sm:$0xf]
    %v106 = vld [vmem:[#allocation5 + $0x28] sm:$0xf]
    %v107 = vld [vmem:[#allocation5 + $0x2c] sm:$0xf]
    %v108 = vld [vmem:[#allocation5 + $0x30] sm:$0xf]
    %v109 = vld [vmem:[#allocation5 + $0x34] sm:$0xf]
    %v110 = vld [vmem:[#allocation5 + $0x38] sm:$0xf]
    %v111 = vld [vmem:[#allocation5 + $0x3c] sm:$0xf]
    %v112 = vlaneseq
    %v113 = vshrl.u32 %v112, 7
    %v114 = vsub.s32 0, %v113
    %v115 = vrot.slane %v93, %v114
    %v118 = vunpack.c.l.b16 %v94
    %v119 = vunpack.c.l.b16 %v95
    %v120 = vpack.c.b16 %v119, %v118
    %v138 = vunpack.c.l.b16 %v96
    %v139 = vunpack.c.l.b16 %v97
    %v140 = vunpack.c.l.b16 %v98
    %v141 = vunpack.c.l.b16 %v99
    %v142 = vunpack.c.l.b16 %v100
    %v143 = vunpack.c.l.b16 %v101
    %v144 = vunpack.c.l.b16 %v102
    %v145 = vunpack.c.l.b16 %v103
    %v146 = vunpack.c.l.b16 %v104
    %v147 = vunpack.c.l.b16 %v105
    %v148 = vunpack.c.l.b16 %v106
    %v149 = vunpack.c.l.b16 %v107
    %v150 = vunpack.c.l.b16 %v108
    %v151 = vunpack.c.l.b16 %v109
    %v152 = vunpack.c.l.b16 %v110
    %v153 = vunpack.c.l.b16 %v111
    %v154 = vpack.c.b16 %v139, %v138
    %v155 = vpack.c.b16 %v141, %v140
    %v156 = vpack.c.b16 %v143, %v142
    %v157 = vpack.c.b16 %v145, %v144
    %v158 = vpack.c.b16 %v147, %v146
    %v159 = vpack.c.b16 %v149, %v148
    %v160 = vpack.c.b16 %v151, %v150
    %v161 = vpack.c.b16 %v153, %v152
    %170 = vmatprep.subr.bf16.mxu0 0
    %171 = vmatpush1.bf16.msra.mxu0 %v154
    %172 = vmatprep.subr.bf16.mxu0 0
    %173 = vmatpush1.bf16.msra.mxu0 %v155
    %174 = vmatprep.subr.bf16.mxu0 0
    %175 = vmatpush1.bf16.msra.mxu0 %v156
    %176 = vmatprep.subr.bf16.mxu0 0
    %177 = vmatpush1.bf16.msra.mxu0 %v157
    %178 = vmatprep.subr.bf16.mxu0 0
    %179 = vmatpush1.bf16.msra.mxu0 %v158
    %180 = vmatprep.subr.bf16.mxu0 0
    %181 = vmatpush1.bf16.msra.mxu0 %v159
    %182 = vmatprep.subr.bf16.mxu0 0
    %183 = vmatpush1.bf16.msra.mxu0 %v160
    %184 = vmatprep.subr.bf16.mxu0 0
    %185 = vmatpush1.bf16.msra.mxu0 %v161
    %186 = vmatprep.subr.bf16.mxu0 0
    %187 = vmatpush1.bf16.msra.mxu0 0
    %188 = vmatprep.subr.bf16.mxu0 0
    %189 = vmatpush1.bf16.msra.mxu0 0
    %190 = vmatprep.subr.bf16.mxu0 0
    %191 = vmatpush1.bf16.msra.mxu0 0
    %192 = vmatprep.subr.bf16.mxu0 0
    %193 = vmatpush1.bf16.msra.mxu0 0
    %194 = vmatprep.subr.bf16.mxu0 0
    %195 = vmatpush1.bf16.msra.mxu0 0
    %196 = vmatprep.subr.bf16.mxu0 0
    %197 = vmatpush1.bf16.msra.mxu0 0
    %198 = vmatprep.subr.bf16.mxu0 0
    %199 = vmatpush1.bf16.msra.mxu0 0
    %200 = vmatprep.subr.bf16.mxu0 0
    %201 = vmatpush1.bf16.msra.mxu0 0
    %202 = vmatprep.mubr.bf16.mxu0 0
    %203 = vmatmul.mubr.bf16.gmra.mrb[0].mxu0 %v120
    %v204 = vpop.f32.mrb[0].mxu0
    %v205 = vadd.f32 %v115, %v204
    %v206 = vpop.f32.mrb[0].mxu0
    %v207 = vpop.f32.mrb[0].mxu0
    %v208 = vadd.f32 %v115, %v207
    %v209 = vpop.f32.mrb[0].mxu0
    %210 = vdwg.mxu0
    %v211 = vmax.f32 %v205, 0.0
    %v212 = vmax.f32 %v208, 0.0
    %v213 = vpack.c.bf16 %v212, %v211
    %v214 = vld [vmem:[#allocation7] sm:$0xf]
    %v215 = vld [vmem:[#allocation7 + $0x4] sm:$0xf]
    %v216 = vld [vmem:[#allocation7 + $0x8] sm:$0xf]
    %v217 = vld [vmem:[#allocation7 + $0xc] sm:$0xf]
    %v218 = vld [vmem:[#allocation7 + $0x10] sm:$0xf]
    %v219 = vld [vmem:[#allocation7 + $0x14] sm:$0xf]
    %v220 = vld [vmem:[#allocation7 + $0x18] sm:$0xf]
    %v221 = vld [vmem:[#allocation7 + $0x1c] sm:$0xf]
    %v222 = vld [vmem:[#allocation7 + $0x20] sm:$0xf]
    %v223 = vld [vmem:[#allocation7 + $0x24] sm:$0xf]
    %v224 = vld [vmem:[#allocation7 + $0x28] sm:$0xf]
    %v225 = vld [vmem:[#allocation7 + $0x2c] sm:$0xf]
    %v226 = vld [vmem:[#allocation7 + $0x30] sm:$0xf]
    %v227 = vld [vmem:[#allocation7 + $0x34] sm:$0xf]
    %v228 = vld [vmem:[#allocation7 + $0x38] sm:$0xf]
    %v229 = vld [vmem:[#allocation7 + $0x3c] sm:$0xf]
    %v230 = vlaneseq
    %v231 = vshrl.u32 %v230, 7
    %v232 = vsub.s32 1, %v231
    %v233 = vrot.slane %v93, %v232
    %v250 = vunpack.c.l.b16 %v214
    %v251 = vunpack.c.l.b16 %v215
    %v252 = vunpack.c.l.b16 %v216
    %v253 = vunpack.c.l.b16 %v217
    %v254 = vunpack.c.l.b16 %v218
    %v255 = vunpack.c.l.b16 %v219
    %v256 = vunpack.c.l.b16 %v220
    %v257 = vunpack.c.l.b16 %v221
    %v258 = vunpack.c.l.b16 %v222
    %v259 = vunpack.c.l.b16 %v223
    %v260 = vunpack.c.l.b16 %v224
    %v261 = vunpack.c.l.b16 %v225
    %v262 = vunpack.c.l.b16 %v226
    %v263 = vunpack.c.l.b16 %v227
    %v264 = vunpack.c.l.b16 %v228
    %v265 = vunpack.c.l.b16 %v229
    %v266 = vpack.c.b16 %v251, %v250
    %v267 = vpack.c.b16 %v253, %v252
    %v268 = vpack.c.b16 %v255, %v254
    %v269 = vpack.c.b16 %v257, %v256
    %v270 = vpack.c.b16 %v259, %v258
    %v271 = vpack.c.b16 %v261, %v260
    %v272 = vpack.c.b16 %v263, %v262
    %v273 = vpack.c.b16 %v265, %v264
    %282 = vmatprep.subr.bf16.mxu0 0
    %283 = vmatpush1.bf16.msra.mxu0 %v266
    %284 = vmatprep.subr.bf16.mxu0 0
    %285 = vmatpush1.bf16.msra.mxu0 %v267
    %286 = vmatprep.subr.bf16.mxu0 0
    %287 = vmatpush1.bf16.msra.mxu0 %v268
    %288 = vmatprep.subr.bf16.mxu0 0
    %289 = vmatpush1.bf16.msra.mxu0 %v269
    %290 = vmatprep.subr.bf16.mxu0 0
    %291 = vmatpush1.bf16.msra.mxu0 %v270
    %292 = vmatprep.subr.bf16.mxu0 0
    %293 = vmatpush1.bf16.msra.mxu0 %v271
    %294 = vmatprep.subr.bf16.mxu0 0
    %295 = vmatpush1.bf16.msra.mxu0 %v272
    %296 = vmatprep.subr.bf16.mxu0 0
    %297 = vmatpush1.bf16.msra.mxu0 %v273
    %298 = vmatprep.subr.bf16.mxu0 0
    %299 = vmatpush1.bf16.msra.mxu0 0
    %300 = vmatprep.subr.bf16.mxu0 0
    %301 = vmatpush1.bf16.msra.mxu0 0
    %302 = vmatprep.subr.bf16.mxu0 0
    %303 = vmatpush1.bf16.msra.mxu0 0
    %304 = vmatprep.subr.bf16.mxu0 0
    %305 = vmatpush1.bf16.msra.mxu0 0
    %306 = vmatprep.subr.bf16.mxu0 0
    %307 = vmatpush1.bf16.msra.mxu0 0
    %308 = vmatprep.subr.bf16.mxu0 0
    %309 = vmatpush1.bf16.msra.mxu0 0
    %310 = vmatprep.subr.bf16.mxu0 0
    %311 = vmatpush1.bf16.msra.mxu0 0
    %312 = vmatprep.subr.bf16.mxu0 0
    %313 = vmatpush1.bf16.msra.mxu0 0
    %314 = vmatprep.mubr.bf16.mxu0 0
    %315 = vmatmul.mubr.bf16.gmra.mrb[0].mxu0 %v213
    %v316 = vpop.f32.mrb[0].mxu0
    %v317 = vadd.f32 %v233, %v316
    %v318 = vpop.f32.mrb[0].mxu0
    %v319 = vpop.f32.mrb[0].mxu0
    %v320 = vadd.f32 %v233, %v319
    %v321 = vpop.f32.mrb[0].mxu0
    %322 = vdwg.mxu0
    %v323 = vmax.f32 %v317, 0.0
    %v324 = vmax.f32 %v320, 0.0
    %v325 = vpack.c.bf16 %v324, %v323
    %v326 = vld [vmem:[#allocation8] sm:$0xf]
    %v327 = vld [vmem:[#allocation8 + $0x4] sm:$0xf]
    %v328 = vld [vmem:[#allocation8 + $0x8] sm:$0xf]
    %v329 = vld [vmem:[#allocation8 + $0xc] sm:$0xf]
    %v330 = vld [vmem:[#allocation8 + $0x10] sm:$0xf]
    %v331 = vld [vmem:[#allocation8 + $0x14] sm:$0xf]
    %v332 = vld [vmem:[#allocation8 + $0x18] sm:$0xf]
    %v333 = vld [vmem:[#allocation8 + $0x1c] sm:$0xf]
    %v334 = vld [vmem:[#allocation8 + $0x20] sm:$0xf]
    %v335 = vld [vmem:[#allocation8 + $0x24] sm:$0xf]
    %v336 = vld [vmem:[#allocation8 + $0x28] sm:$0xf]
    %v337 = vld [vmem:[#allocation8 + $0x2c] sm:$0xf]
    %v338 = vld [vmem:[#allocation8 + $0x30] sm:$0xf]
    %v339 = vld [vmem:[#allocation8 + $0x34] sm:$0xf]
    %v340 = vld [vmem:[#allocation8 + $0x38] sm:$0xf]
    %v341 = vld [vmem:[#allocation8 + $0x3c] sm:$0xf]
    %v342 = vlaneseq
    %v343 = vshrl.u32 %v342, 7
    %v344 = vsub.s32 2, %v343
    %v345 = vrot.slane %v93, %v344
    %v362 = vunpack.c.l.b16 %v326
    %v363 = vunpack.c.l.b16 %v327
    %v364 = vunpack.c.l.b16 %v328
    %v365 = vunpack.c.l.b16 %v329
    %v366 = vunpack.c.l.b16 %v330
    %v367 = vunpack.c.l.b16 %v331
    %v368 = vunpack.c.l.b16 %v332
    %v369 = vunpack.c.l.b16 %v333
    %v370 = vunpack.c.l.b16 %v334
    %v371 = vunpack.c.l.b16 %v335
    %v372 = vunpack.c.l.b16 %v336
    %v373 = vunpack.c.l.b16 %v337
    %v374 = vunpack.c.l.b16 %v338
    %v375 = vunpack.c.l.b16 %v339
    %v376 = vunpack.c.l.b16 %v340
    %v377 = vunpack.c.l.b16 %v341
    %v378 = vpack.c.b16 %v363, %v362
    %v379 = vpack.c.b16 %v365, %v364
    %v380 = vpack.c.b16 %v367, %v366
    %v381 = vpack.c.b16 %v369, %v368
    %v382 = vpack.c.b16 %v371, %v370
    %v383 = vpack.c.b16 %v373, %v372
    %v384 = vpack.c.b16 %v375, %v374
    %v385 = vpack.c.b16 %v377, %v376
    %394 = vmatprep.subr.bf16.mxu0 0
    %395 = vmatpush1.bf16.msra.mxu0 %v378
    %396 = vmatprep.subr.bf16.mxu0 0
    %397 = vmatpush1.bf16.msra.mxu0 %v379
    %398 = vmatprep.subr.bf16.mxu0 0
    %399 = vmatpush1.bf16.msra.mxu0 %v380
    %400 = vmatprep.subr.bf16.mxu0 0
    %401 = vmatpush1.bf16.msra.mxu0 %v381
    %402 = vmatprep.subr.bf16.mxu0 0
    %403 = vmatpush1.bf16.msra.mxu0 %v382
    %404 = vmatprep.subr.bf16.mxu0 0
    %405 = vmatpush1.bf16.msra.mxu0 %v383
    %406 = vmatprep.subr.bf16.mxu0 0
    %407 = vmatpush1.bf16.msra.mxu0 %v384
    %408 = vmatprep.subr.bf16.mxu0 0
    %409 = vmatpush1.bf16.msra.mxu0 %v385
    %410 = vmatprep.subr.bf16.mxu0 0
    %411 = vmatpush1.bf16.msra.mxu0 0
    %412 = vmatprep.subr.bf16.mxu0 0
    %413 = vmatpush1.bf16.msra.mxu0 0
    %414 = vmatprep.subr.bf16.mxu0 0
    %415 = vmatpush1.bf16.msra.mxu0 0
    %416 = vmatprep.subr.bf16.mxu0 0
    %417 = vmatpush1.bf16.msra.mxu0 0
    %418 = vmatprep.subr.bf16.mxu0 0
    %419 = vmatpush1.bf16.msra.mxu0 0
    %420 = vmatprep.subr.bf16.mxu0 0
    %421 = vmatpush1.bf16.msra.mxu0 0
    %422 = vmatprep.subr.bf16.mxu0 0
    %423 = vmatpush1.bf16.msra.mxu0 0
    %424 = vmatprep.subr.bf16.mxu0 0
    %425 = vmatpush1.bf16.msra.mxu0 0
    %426 = vmatprep.mubr.bf16.mxu0 0
    %427 = vmatmul.mubr.bf16.gmra.mrb[0].mxu0 %v325
    %v428 = vpop.f32.mrb[0].mxu0
    %v429 = vadd.f32 %v345, %v428
    %v430 = vpop.f32.mrb[0].mxu0
    %v431 = vpop.f32.mrb[0].mxu0
    %v432 = vadd.f32 %v345, %v431
    %v433 = vpop.f32.mrb[0].mxu0
    %434 = vdwg.mxu0
    %v435 = vpack.c.bf16 %v432, %v429
    %v436 = vld [vmem:[#allocation10] sm:$0xf]
    %v437 = vld [vmem:[#allocation10 + $0x4] sm:$0xf]
    %v438 = vld [vmem:[#allocation10 + $0x8] sm:$0xf]
    %v439 = vld [vmem:[#allocation10 + $0xc] sm:$0xf]
    %v440 = vld [vmem:[#allocation10 + $0x10] sm:$0xf]
    %v441 = vld [vmem:[#allocation10 + $0x14] sm:$0xf]
    %v442 = vld [vmem:[#allocation10 + $0x18] sm:$0xf]
    %v443 = vld [vmem:[#allocation10 + $0x1c] sm:$0xf]
    %v444 = vld [vmem:[#allocation10 + $0x20] sm:$0xf]
    %v445 = vld [vmem:[#allocation10 + $0x24] sm:$0xf]
    %v446 = vld [vmem:[#allocation10 + $0x28] sm:$0xf]
    %v447 = vld [vmem:[#allocation10 + $0x2c] sm:$0xf]
    %v448 = vld [vmem:[#allocation10 + $0x30] sm:$0xf]
    %v449 = vld [vmem:[#allocation10 + $0x34] sm:$0xf]
    %v450 = vld [vmem:[#allocation10 + $0x38] sm:$0xf]
    %v451 = vld [vmem:[#allocation10 + $0x3c] sm:$0xf]
    %v452 = vlaneseq
    %v453 = vshrl.u32 %v452, 7
    %v454 = vsub.s32 3, %v453
    %v455 = vrot.slane %v93, %v454
    %v472 = vunpack.c.l.b16 %v436
    %v473 = vunpack.c.l.b16 %v437
    %v474 = vunpack.c.l.b16 %v438
    %v475 = vunpack.c.l.b16 %v439
    %v476 = vunpack.c.l.b16 %v440
    %v477 = vunpack.c.l.b16 %v441
    %v478 = vunpack.c.l.b16 %v442
    %v479 = vunpack.c.l.b16 %v443
    %v480 = vunpack.c.l.b16 %v444
    %v481 = vunpack.c.l.b16 %v445
    %v482 = vunpack.c.l.b16 %v446
    %v483 = vunpack.c.l.b16 %v447
    %v484 = vunpack.c.l.b16 %v448
    %v485 = vunpack.c.l.b16 %v449
    %v486 = vunpack.c.l.b16 %v450
    %v487 = vunpack.c.l.b16 %v451
    %v488 = vpack.c.b16 %v473, %v472
    %v489 = vpack.c.b16 %v475, %v474
    %v490 = vpack.c.b16 %v477, %v476
    %v491 = vpack.c.b16 %v479, %v478
    %v492 = vpack.c.b16 %v481, %v480
    %v493 = vpack.c.b16 %v483, %v482
    %v494 = vpack.c.b16 %v485, %v484
    %v495 = vpack.c.b16 %v487, %v486
    %504 = vmatprep.subr.bf16.mxu0 0
    %505 = vmatpush1.bf16.msra.mxu0 %v488
    %506 = vmatprep.subr.bf16.mxu0 0
    %507 = vmatpush1.bf16.msra.mxu0 %v489
    %508 = vmatprep.subr.bf16.mxu0 0
    %509 = vmatpush1.bf16.msra.mxu0 %v490
    %510 = vmatprep.subr.bf16.mxu0 0
    %511 = vmatpush1.bf16.msra.mxu0 %v491
    %512 = vmatprep.subr.bf16.mxu0 0
    %513 = vmatpush1.bf16.msra.mxu0 %v492
    %514 = vmatprep.subr.bf16.mxu0 0
    %515 = vmatpush1.bf16.msra.mxu0 %v493
    %516 = vmatprep.subr.bf16.mxu0 0
    %517 = vmatpush1.bf16.msra.mxu0 %v494
    %518 = vmatprep.subr.bf16.mxu0 0
    %519 = vmatpush1.bf16.msra.mxu0 %v495
    %520 = vmatprep.subr.bf16.mxu0 0
    %521 = vmatpush1.bf16.msra.mxu0 0
    %522 = vmatprep.subr.bf16.mxu0 0
    %523 = vmatpush1.bf16.msra.mxu0 0
    %524 = vmatprep.subr.bf16.mxu0 0
    %525 = vmatpush1.bf16.msra.mxu0 0
    %526 = vmatprep.subr.bf16.mxu0 0
    %527 = vmatpush1.bf16.msra.mxu0 0
    %528 = vmatprep.subr.bf16.mxu0 0
    %529 = vmatpush1.bf16.msra.mxu0 0
    %530 = vmatprep.subr.bf16.mxu0 0
    %531 = vmatpush1.bf16.msra.mxu0 0
    %532 = vmatprep.subr.bf16.mxu0 0
    %533 = vmatpush1.bf16.msra.mxu0 0
    %534 = vmatprep.subr.bf16.mxu0 0
    %535 = vmatpush1.bf16.msra.mxu0 0
    %536 = vmatprep.mubr.bf16.mxu0 0
    %537 = vmatmul.mubr.bf16.gmra.mrb[0].mxu0 %v435
    %v538 = vpop.f32.mrb[0].mxu0
    %v539 = vadd.f32 %v455, %v538
    %v540 = vpop.f32.mrb[0].mxu0
    %v541 = vpop.f32.mrb[0].mxu0
    %v542 = vadd.f32 %v455, %v541
    %v543 = vpop.f32.mrb[0].mxu0
    %544 = vdwg.mxu0
    %545 = vst [vmem:[#allocation11] sm:$0xff] %v539
    %546 = vst [vmem:[#allocation11 + $0x8] sm:$0xff] %v542
    // Predicated region
    $region46: #{tpu_custom_call.1} parent=1 // pred_check
      _
    $region47: #{tpu_custom_call.1} parent=1 // pred_check_branch
      %548 = sbr.rel (0) target = $region49
    $region48: #{tpu_custom_call.1} parent=1 // pred_region
      %s550 = ssub.s32 256, 256
      %551 = vsyncadd [#allocation4], %s550
      %s552 = sshll.u32 [#allocation11], 4
      %s553 = int_to_ptr.vmem [resolvable:$true] %s552
      %558 = dma.vmem_to_hbm [thread:$0]  %s553, 256, %s6, [#allocation4], 128, 128, 8
    $region49: #{tpu_custom_call.1} parent=1 // pred_fallthru
      _
    // Predicated region
    $region50: #{tpu_custom_call.1} parent=1 // pred_check
      _
    $region51: #{tpu_custom_call.1} parent=1 // pred_check_branch
      %560 = sbr.rel (0) target = $region53
    $region52: #{tpu_custom_call.1} parent=1 // pred_region
      %561 = dma.done [#allocation4], 256
    $region53: #{tpu_custom_call.1} parent=1 // pred_fallthru
      _
    %562 = vsyncpa [#allocation3], 1
    %563 = vsyncpa [#allocation6], 1
    %564 = vsyncpa [#allocation9], 1
    %565 = vsyncpa [#allocation4], 1

</llo_original>
